<compile_context>
chip_gen: v7x
topology: tpu7x:2x2x1
jax: 0.10.0
libtpu: 0.0.40
codegen_flags: <defaults>
</compile_context>

<pallas_src>
import jax
import jax.numpy as jnp
import numpy as np
from jax import lax
from jax.experimental import pallas as pl
from jax.experimental.pallas import tpu as pltpu

# ----------------------------- model config -----------------------------
B = 2          # batch size                       (power of two)
S = 16         # decoder sequence length          (power of two)
V = 32         # vocab size
H = 32         # hidden_dim (d_model)
MAX_NODES = 4  # Grapher.max_nodes                (power of two)
C = 8          # EdgesClass num_classes
NODE_SEP_ID = 3

BS = B * S                          # 32  decoder rows (b*S + s)
BN = B * MAX_NODES                  # 8   (batch, node) rows (b*N + n)
NPAIR = MAX_NODES * MAX_NODES * B   # 32  pairwise rows ((n1*N + n2)*B + b)
VP = 128                            # vocab padded to a full lane tile
CP = 128                            # edge classes padded to a full lane tile
LANES = 128

LOG2_S = S.bit_length() - 1                     # 4
LOG2_N = MAX_NODES.bit_length() - 1             # 2
LOG2_NB = (MAX_NODES * B).bit_length() - 1      # 3
LOG2_B = B.bit_length() - 1                     # 1

# Row offsets inside the concatenated weight slab (all multiples of 8).
R_EMBWH = 0     # (V, H)   emb_table @ wh (folded), lanes 0:H used
R_WLM = 32      # (H, VP)  LM head, pad cols zero
R_W1 = 64       # (H, C)   EdgesClass first linear, lanes 0:C used
R_W2 = 96       # (C, CP)  EdgesClass last linear
R_BIAS = 104    # (8,128): row0 bh, row1 blm (-1e30 pads), row2 b1, row3 b2
R_TOTAL = 112

_VMEM = pl.BlockSpec(memory_space=pltpu.MemorySpace.VMEM)


# --------------------------- fused Grapher kernel ---------------------------
def grapher_kernel(ids_ref, w_ref, logits_ref, edges_ref):
    f32, bf16, i32 = jnp.float32, jnp.bfloat16, jnp.int32

    # static slices of the single weight slab (row offsets are 8-aligned)
    embt_wh = w_ref[R_EMBWH:R_EMBWH + V, 0:H]     # (V, H)
    wlm = w_ref[R_WLM:R_WLM + H, :]               # (H, VP)
    w1 = w_ref[R_W1:R_W1 + H, 0:C]                # (H, C)
    w2 = w_ref[R_W2:R_W2 + C, :]                  # (C, CP)
    bias = w_ref[R_BIAS:R_BIAS + 8, :]            # (8, 128)
    bh = bias[0:1, 0:H]                           # (1, H)
    blm = bias[1:2, :]                            # (1, VP)  pads = -1e30
    b1 = bias[2:3, 0:C]                           # (1, C)
    b2 = bias[3:4, :]                             # (1, CP)

    # 1) embedding gather fused with the first dense layer (emb_table@wh folded).
    ids = ids_ref[...]                                            # (BS, 1) i32
    vocab_lane = lax.broadcasted_iota(i32, (BS, V), 1)
    onehot = (vocab_lane == ids).astype(f32)                      # (BS, V)
    hid = jnp.tanh(jnp.dot(onehot, embt_wh, preferred_element_type=f32) + bh)

    # 2) LM head (kept f32: argmax-critical, must match the f32 reference).
    logits = jnp.dot(hid, wlm, preferred_element_type=f32) + blm  # (BS, VP)
    logits_ref[...] = logits                                      # lane-dense store

    # 3) greedy token = argmax over vocab (padded lanes carry -1e30 via blm pad).
    row_max = jnp.max(logits, axis=-1, keepdims=True)
    lane = lax.broadcasted_iota(i32, (BS, VP), 1)
    gen = jnp.min(jnp.where(logits == row_max, lane, VP),
                  axis=-1, keepdims=True)                         # (BS, 1) i32

    # 4) split_nodes.  Per-position node code is produced as a ROW vector via
    #    sublane reductions (no matmul, no transpose), so the selection matrix
    #    is built directly in (BN, BS) layout for a plain jnp.dot.
    sep_col = (gen == NODE_SEP_ID).astype(f32)                    # (BS, 1)
    rp = lax.broadcasted_iota(i32, (BS, BS), 0)                   # r' (summed)
    rc = lax.broadcasted_iota(i32, (BS, BS), 1)                   # r  (kept)
    same_b = (rp >> LOG2_S) == (rc >> LOG2_S)
    sep_b = jnp.broadcast_to(sep_col, (BS, BS))
    cum_row = jnp.sum(jnp.where(jnp.logical_and(rp <= rc, same_b), sep_b, 0.0),
                      axis=0, keepdims=True)                      # (1, BS) exact ints
    sep_row = jnp.sum(jnp.where(rp == rc, sep_b, 0.0),
                      axis=0, keepdims=True)                      # (1, BS)
    node_code = jnp.where(sep_row > 0.5, -1, cum_row.astype(i32)) # (1, BS)

    q_sub = lax.broadcasted_iota(i32, (BN, BS), 0)                # q = b*N + n
    r_lane = lax.broadcasted_iota(i32, (BN, BS), 1)               # r = b*S + s
    sel = jnp.logical_and(node_code == (q_sub & (MAX_NODES - 1)),
                          (r_lane >> LOG2_S) == (q_sub >> LOG2_N))  # (BN, BS)
    cnt = jnp.maximum(jnp.sum(sel.astype(f32), axis=1, keepdims=True), 1.0)
    # bf16 operands (exact 0/1 LHS) -> single-pass MXU; exact f32 mean afterwards.
    feats = jnp.dot(sel.astype(bf16), hid.astype(bf16),
                    preferred_element_type=f32) / cnt             # (BN, H)

    # 5) all-pairs node-feature differences via a +/-1 selection matmul.
    #    pair row p = (n1*N + n2)*B + b  ->  features[n1, b] - features[n2, b]
    p_sub = lax.broadcasted_iota(i32, (NPAIR, BN), 0)
    q_lane = lax.broadcasted_iota(i32, (NPAIR, BN), 1)
    n1 = p_sub >> LOG2_NB
    n2 = (p_sub >> LOG2_B) & (MAX_NODES - 1)
    bb = p_sub & (B - 1)
    diff_sel = ((q_lane == bb * MAX_NODES + n1).astype(bf16)
                - (q_lane == bb * MAX_NODES + n2).astype(bf16))   # (NPAIR, BN)
    pair = jnp.dot(diff_sel, feats.astype(bf16),
                   preferred_element_type=f32)                    # (NPAIR, H)

    # 6) EdgesClass MLP (eval-mode dropout == identity); classes padded to CP lanes.
    hmlp = jnp.maximum(jnp.dot(pair, w1, preferred_element_type=f32) + b1, 0.0)
    edges_ref[...] = (jnp.dot(hmlp, w2, preferred_element_type=f32)
                      + b2)                                       # (NPAIR, CP) lane-dense


_COST = pl.CostEstimate(
    flops=460_000,
    transcendentals=BS * H,
    bytes_accessed=(BS + R_TOTAL * LANES + BS * VP + NPAIR * CP) * 4,
)


def run_grapher_kernel(ids_col, wcat):
    return pl.pallas_call(
        grapher_kernel,
        out_shape=(jax.ShapeDtypeStruct((BS, VP), jnp.float32),
                   jax.ShapeDtypeStruct((NPAIR, CP), jnp.float32)),
        in_specs=[_VMEM, _VMEM],
        out_specs=(_VMEM, _VMEM),
        cost_estimate=_COST,
    )(ids_col, wcat)


# ------------------------------ parameters ------------------------------
def init_params(key):
    ks = jax.random.split(key, 7)
    scale = 0.1
    return dict(
        emb_table=scale * jax.random.normal(ks[0], (V, H), jnp.float32),
        wh=scale * jax.random.normal(ks[1], (H, H), jnp.float32),
        bh=scale * jax.random.normal(ks[2], (1, H), jnp.float32),
        wlm=scale * jax.random.normal(ks[3], (H, V), jnp.float32),
        blm=jnp.zeros((1, V), jnp.float32),
        # EdgesClass: first Linear(H -> C), last Linear(C -> C), num_layers = 0
        w1=scale * jax.random.normal(ks[4], (H, C), jnp.float32),
        b1=scale * jax.random.normal(ks[5], (1, C), jnp.float32),
        w2=scale * jax.random.normal(ks[6], (C, C), jnp.float32),
        b2=jnp.zeros((1, C), jnp.float32),
    )


def prepare_weights(params):
    """One-time param prep: fold emb_table@wh, pad to 128 lanes, concat to one slab."""
    def lanes(m, fill=0.0):
        return jnp.pad(m, ((0, 0), (0, LANES - m.shape[1])), constant_values=fill)

    embt_wh = params["emb_table"] @ params["wh"]              # fold: (V, H)
    blocks = [
        lanes(embt_wh),                                       # rows   0:32
        lanes(params["wlm"]),                                 # rows  32:64
        lanes(params["w1"]),                                  # rows  64:96
        lanes(params["w2"]),                                  # rows  96:104
        lanes(params["bh"]),                                  # row  104
        lanes(params["blm"], fill=-1e30),                     # row  105 (argmax mask)
        lanes(params["b1"]),                                  # row  106
        lanes(params["b2"]),                                  # row  107
        jnp.zeros((4, LANES), jnp.float32),                   # rows 108:112
    ]
    wcat = jnp.concatenate(blocks, axis=0)
    assert wcat.shape == (R_TOTAL, LANES)
    return wcat


# ----------------------------- Grapher forward -----------------------------
@jax.jit
def grapher_forward(wcat, text, text_mask, target_nodes, target_nodes_mask):
    del text, text_mask, target_nodes_mask  # consumed only by the real transformer
    ids_col = target_nodes.reshape(BS, 1).astype(jnp.int32)
    logits_p, edges_p = run_grapher_kernel(ids_col, wcat)
    logits_nodes = logits_p[:, :V].reshape(B, S, V)
    logits_edges = edges_p[:, :C].reshape(MAX_NODES, MAX_NODES, B, C)
    return logits_nodes, logits_edges


# ------------------------- pure-JAX reference check -------------------------
def grapher_reference(params, target_nodes):
    emb = params["emb_table"][target_nodes]
    h = jnp.tanh(emb @ params["wh"] + params["bh"][0])
    logits_nodes = h @ params["wlm"] + params["blm"][0]
    gen_seq = jnp.argmax(logits_nodes, axis=-1)

    is_sep = gen_seq == NODE_SEP_ID
    cum = jnp.cumsum(is_sep.astype(jnp.int32), axis=1)
    feats_nodes = []
    for n in range(MAX_NODES):
        mask = ((cum == n) & (~is_sep)).astype(jnp.float32)[:, :, None]
        summed = jnp.sum(h * mask, axis=1)
        count = jnp.maximum(jnp.sum(mask, axis=1), 1.0)
        feats_nodes.append(summed / count)
    features = jnp.stack(feats_nodes, axis=0)                       # (N, B, H)

    pair = (features[:, None] - features[None, :]).reshape(-1, H)
    hmlp = jnp.maximum(pair @ params["w1"] + params["b1"][0], 0.0)
    logits_edges = (hmlp @ params["w2"] + params["b2"][0]).reshape(
        MAX_NODES, MAX_NODES, B, C)
    return logits_nodes, logits_edges


if __name__ == "__main__":
    key = jax.random.PRNGKey(0)
    pkey, k1, k2 = jax.random.split(key, 3)
    params = init_params(pkey)
    wcat = prepare_weights(params)          # one-time prep, outside the jitted step

    text = jax.random.randint(k1, (B, S), 0, V, dtype=jnp.int32)
    text_mask = jnp.ones((B, S), jnp.int32)
    target_nodes = jax.random.randint(k2, (B, S), 0, V, dtype=jnp.int32)
    target_nodes_mask = jnp.ones((B, S), jnp.int32)

    logits_nodes, logits_edges = grapher_forward(
        wcat, text, text_mask, target_nodes, target_nodes_mask)
    jax.block_until_ready((logits_nodes, logits_edges))

    ref_nodes, ref_edges = grapher_reference(params, target_nodes)
    assert logits_nodes.shape == (B, S, V)
    assert logits_edges.shape == (MAX_NODES, MAX_NODES, B, C)
    np.testing.assert_allclose(np.asarray(logits_nodes), np.asarray(ref_nodes),
                               rtol=2e-2, atol=2e-2)
    np.testing.assert_allclose(np.asarray(logits_edges), np.asarray(ref_edges),
                               rtol=2e-2, atol=2e-2)

    print("KERNEL_OK")
</pallas_src>

<mosaic_0001>
module attributes {stable_mosaic.version = 11 : i64} {
  func.func @grapher_kernel(%arg0: memref<32x1xi32, #tpu.memory_space<vmem>>, %arg1: memref<112x128xf32, #tpu.memory_space<vmem>>, %arg2: memref<32x128xf32, #tpu.memory_space<vmem>>, %arg3: memref<32x128xf32, #tpu.memory_space<vmem>>) attributes {dimension_semantics = [], scalar_prefetch = 0 : i64, scratch_operands = 0 : i64, tpu.core_type = #tpu.core_type<tc>} {
    %c0 = arith.constant 0 : index
    %c0_0 = arith.constant 0 : index
    %0 = vector.load %arg1[%c0, %c0_0] : memref<112x128xf32, #tpu.memory_space<vmem>>, vector<32x32xf32>
    %c32 = arith.constant 32 : index
    %c0_1 = arith.constant 0 : index
    %1 = vector.load %arg1[%c32, %c0_1] : memref<112x128xf32, #tpu.memory_space<vmem>>, vector<32x128xf32>
    %c64 = arith.constant 64 : index
    %c0_2 = arith.constant 0 : index
    %2 = vector.load %arg1[%c64, %c0_2] : memref<112x128xf32, #tpu.memory_space<vmem>>, vector<32x8xf32>
    %c96 = arith.constant 96 : index
    %c0_3 = arith.constant 0 : index
    %3 = vector.load %arg1[%c96, %c0_3] : memref<112x128xf32, #tpu.memory_space<vmem>>, vector<8x128xf32>
    %c104 = arith.constant 104 : index
    %c0_4 = arith.constant 0 : index
    %4 = vector.load %arg1[%c104, %c0_4] : memref<112x128xf32, #tpu.memory_space<vmem>>, vector<8x128xf32>
    %5 = vector.extract_strided_slice %4 {offsets = [0, 0], sizes = [1, 32], strides = [1, 1]} : vector<8x128xf32> to vector<1x32xf32>
    %6 = vector.extract_strided_slice %4 {offsets = [1, 0], sizes = [1, 128], strides = [1, 1]} : vector<8x128xf32> to vector<1x128xf32>
    %7 = vector.extract_strided_slice %4 {offsets = [2, 0], sizes = [1, 8], strides = [1, 1]} : vector<8x128xf32> to vector<1x8xf32>
    %8 = vector.extract_strided_slice %4 {offsets = [3, 0], sizes = [1, 128], strides = [1, 1]} : vector<8x128xf32> to vector<1x128xf32>
    %c0_5 = arith.constant 0 : index
    %c0_6 = arith.constant 0 : index
    %9 = vector.load %arg0[%c0_5, %c0_6] : memref<32x1xi32, #tpu.memory_space<vmem>>, vector<32x1xi32>
    %10 = tpu.iota {dimensions = array<i32: 1>} : vector<32x32xi32>
    %11 = vector.broadcast %9 : vector<32x1xi32> to vector<32x32xi32>
    %12 = arith.cmpi eq, %10, %11 : vector<32x32xi32>
    %13 = arith.extui %12 : vector<32x32xi1> to vector<32x32xi32>
    %14 = arith.sitofp %13 : vector<32x32xi32> to vector<32x32xf32>
    %cst = arith.constant dense<0.000000e+00> : vector<32x32xf32>
    %15 = tpu.matmul %14, %0, %cst {dimension_numbers = #tpu.dot_dimension_numbers<[1], [0], [0], [1], [0, 0, 1, 1], [], []>} : vector<32x32xf32>, vector<32x32xf32>, vector<32x32xf32> -> vector<32x32xf32>
    %16 = vector.broadcast %5 : vector<1x32xf32> to vector<32x32xf32>
    %17 = arith.addf %15, %16 : vector<32x32xf32>
    %18 = math.tanh %17 : vector<32x32xf32>
    %cst_7 = arith.constant dense<0.000000e+00> : vector<32x128xf32>
    %19 = tpu.matmul %18, %1, %cst_7 {dimension_numbers = #tpu.dot_dimension_numbers<[1], [0], [0], [1], [0, 0, 1, 1], [], []>} : vector<32x32xf32>, vector<32x128xf32>, vector<32x128xf32> -> vector<32x128xf32>
    %20 = vector.broadcast %6 : vector<1x128xf32> to vector<32x128xf32>
    %21 = arith.addf %19, %20 : vector<32x128xf32>
    %c0_8 = arith.constant 0 : index
    %c0_9 = arith.constant 0 : index
    %22 = vector.load %arg2[%c0_8, %c0_9] : memref<32x128xf32, #tpu.memory_space<vmem>>, vector<32x128xf32>
    tpu.vector_store %arg2[%c0_8, %c0_9], %21 {strides = array<i32>} : memref<32x128xf32, #tpu.memory_space<vmem>>, vector<32x128xf32>,
    %cst_10 = arith.constant dense<0xFF800000> : vector<32xf32>
    %23 = vector.multi_reduction <maximumf>, %21, %cst_10 [1] : vector<32x128xf32> to vector<32xf32>
    %24 = vector.shape_cast %23 : vector<32xf32> to vector<32x1xf32>
    %25 = tpu.iota {dimensions = array<i32: 1>} : vector<32x128xi32>
    %26 = vector.broadcast %24 : vector<32x1xf32> to vector<32x128xf32>
    %27 = arith.cmpf oeq, %21, %26 : vector<32x128xf32>
    %c128_i32 = arith.constant 128 : i32
    %28 = vector.broadcast %c128_i32 : i32 to vector<32x128xi32>
    %29 = arith.select %27, %25, %28 : vector<32x128xi1>, vector<32x128xi32>
    %cst_11 = arith.constant dense<2147483647> : vector<32xi32>
    %30 = vector.multi_reduction <minsi>, %29, %cst_11 [1] : vector<32x128xi32> to vector<32xi32>
    %31 = vector.shape_cast %30 : vector<32xi32> to vector<32x1xi32>
    %c3_i32 = arith.constant 3 : i32
    %32 = vector.broadcast %c3_i32 : i32 to vector<32x1xi32>
    %33 = arith.cmpi eq, %31, %32 : vector<32x1xi32>
    %34 = arith.extui %33 : vector<32x1xi1> to vector<32x1xi32>
    %35 = arith.sitofp %34 : vector<32x1xi32> to vector<32x1xf32>
    %36 = tpu.iota {dimensions = array<i32: 0>} : vector<32x32xi32>
    %37 = tpu.iota {dimensions = array<i32: 1>} : vector<32x32xi32>
    %c4_i32 = arith.constant 4 : i32
    %38 = vector.broadcast %c4_i32 : i32 to vector<32x32xi32>
    %39 = arith.shrsi %36, %38 : vector<32x32xi32>
    %c4_i32_12 = arith.constant 4 : i32
    %40 = vector.broadcast %c4_i32_12 : i32 to vector<32x32xi32>
    %41 = arith.shrsi %37, %40 : vector<32x32xi32>
    %42 = arith.cmpi eq, %39, %41 : vector<32x32xi32>
    %43 = vector.shape_cast %35 : vector<32x1xf32> to vector<32x1xf32>
    %44 = vector.broadcast %43 : vector<32x1xf32> to vector<32x32xf32>
    %45 = arith.cmpi sle, %36, %37 : vector<32x32xi32>
    %46 = arith.andi %45, %42 : vector<32x32xi1>
    %cst_13 = arith.constant 0.000000e+00 : f32
    %47 = vector.broadcast %cst_13 : f32 to vector<32x32xf32>
    %48 = arith.select %46, %44, %47 : vector<32x32xi1>, vector<32x32xf32>
    %cst_14 = arith.constant dense<0.000000e+00> : vector<32xf32>
    %49 = vector.multi_reduction <add>, %48, %cst_14 [0] : vector<32x32xf32> to vector<32xf32>
    %50 = vector.shape_cast %49 : vector<32xf32> to vector<1x32xf32>
    %51 = arith.cmpi eq, %36, %37 : vector<32x32xi32>
    %cst_15 = arith.constant 0.000000e+00 : f32
    %52 = vector.broadcast %cst_15 : f32 to vector<32x32xf32>
    %53 = arith.select %51, %44, %52 : vector<32x32xi1>, vector<32x32xf32>
    %cst_16 = arith.constant dense<0.000000e+00> : vector<32xf32>
    %54 = vector.multi_reduction <add>, %53, %cst_16 [0] : vector<32x32xf32> to vector<32xf32>
    %55 = vector.shape_cast %54 : vector<32xf32> to vector<1x32xf32>
    %cst_17 = arith.constant 5.000000e-01 : f32
    %56 = vector.broadcast %cst_17 : f32 to vector<1x32xf32>
    %57 = arith.cmpf ogt, %55, %56 : vector<1x32xf32>
    %58 = arith.fptosi %50 : vector<1x32xf32> to vector<1x32xi32>
    %c-1_i32 = arith.constant -1 : i32
    %59 = vector.broadcast %c-1_i32 : i32 to vector<1x32xi32>
    %60 = arith.select %57, %59, %58 : vector<1x32xi1>, vector<1x32xi32>
    %61 = tpu.iota {dimensions = array<i32: 0>} : vector<8x32xi32>
    %62 = tpu.iota {dimensions = array<i32: 1>} : vector<8x32xi32>
    %c3_i32_18 = arith.constant 3 : i32
    %63 = vector.broadcast %c3_i32_18 : i32 to vector<8x32xi32>
    %64 = arith.andi %61, %63 : vector<8x32xi32>
    %65 = vector.broadcast %60 : vector<1x32xi32> to vector<8x32xi32>
    %66 = arith.cmpi eq, %65, %64 : vector<8x32xi32>
    %c4_i32_19 = arith.constant 4 : i32
    %67 = vector.broadcast %c4_i32_19 : i32 to vector<8x32xi32>
    %68 = arith.shrsi %62, %67 : vector<8x32xi32>
    %c2_i32 = arith.constant 2 : i32
    %69 = vector.broadcast %c2_i32 : i32 to vector<8x32xi32>
    %70 = arith.shrsi %61, %69 : vector<8x32xi32>
    %71 = arith.cmpi eq, %68, %70 : vector<8x32xi32>
    %72 = arith.andi %66, %71 : vector<8x32xi1>
    %73 = arith.extui %72 : vector<8x32xi1> to vector<8x32xi32>
    %74 = arith.sitofp %73 : vector<8x32xi32> to vector<8x32xf32>
    %cst_20 = arith.constant dense<0.000000e+00> : vector<8xf32>
    %75 = vector.multi_reduction <add>, %74, %cst_20 [1] : vector<8x32xf32> to vector<8xf32>
    %76 = vector.shape_cast %75 : vector<8xf32> to vector<8x1xf32>
    %cst_21 = arith.constant 1.000000e+00 : f32
    %77 = vector.broadcast %cst_21 : f32 to vector<8x1xf32>
    %78 = arith.maximumf %76, %77 : vector<8x1xf32>
    %79 = arith.extui %72 : vector<8x32xi1> to vector<8x32xi32>
    %80 = arith.sitofp %79 : vector<8x32xi32> to vector<8x32xf32>
    %81 = arith.truncf %80 : vector<8x32xf32> to vector<8x32xbf16>
    %82 = arith.truncf %18 : vector<32x32xf32> to vector<32x32xbf16>
    %cst_22 = arith.constant dense<0.000000e+00> : vector<8x32xf32>
    %83 = tpu.matmul %81, %82, %cst_22 {dimension_numbers = #tpu.dot_dimension_numbers<[1], [0], [0], [1], [0, 0, 1, 1], [], []>} : vector<8x32xbf16>, vector<32x32xbf16>, vector<8x32xf32> -> vector<8x32xf32>
    %84 = vector.broadcast %78 : vector<8x1xf32> to vector<8x32xf32>
    %85 = arith.divf %83, %84 : vector<8x32xf32>
    %86 = tpu.iota {dimensions = array<i32: 0>} : vector<32x8xi32>
    %87 = tpu.iota {dimensions = array<i32: 1>} : vector<32x8xi32>
    %c3_i32_23 = arith.constant 3 : i32
    %88 = vector.broadcast %c3_i32_23 : i32 to vector<32x8xi32>
    %89 = arith.shrsi %86, %88 : vector<32x8xi32>
    %c1_i32 = arith.constant 1 : i32
    %90 = vector.broadcast %c1_i32 : i32 to vector<32x8xi32>
    %91 = arith.shrsi %86, %90 : vector<32x8xi32>
    %c3_i32_24 = arith.constant 3 : i32
    %92 = vector.broadcast %c3_i32_24 : i32 to vector<32x8xi32>
    %93 = arith.andi %91, %92 : vector<32x8xi32>
    %c1_i32_25 = arith.constant 1 : i32
    %94 = vector.broadcast %c1_i32_25 : i32 to vector<32x8xi32>
    %95 = arith.andi %86, %94 : vector<32x8xi32>
    %c4_i32_26 = arith.constant 4 : i32
    %96 = vector.broadcast %c4_i32_26 : i32 to vector<32x8xi32>
    %97 = arith.muli %95, %96 : vector<32x8xi32>
    %98 = arith.addi %97, %89 : vector<32x8xi32>
    %99 = arith.cmpi eq, %87, %98 : vector<32x8xi32>
    %100 = arith.extui %99 : vector<32x8xi1> to vector<32x8xi32>
    %101 = arith.sitofp %100 : vector<32x8xi32> to vector<32x8xf32>
    %102 = arith.truncf %101 : vector<32x8xf32> to vector<32x8xbf16>
    %c4_i32_27 = arith.constant 4 : i32
    %103 = vector.broadcast %c4_i32_27 : i32 to vector<32x8xi32>
    %104 = arith.muli %95, %103 : vector<32x8xi32>
    %105 = arith.addi %104, %93 : vector<32x8xi32>
    %106 = arith.cmpi eq, %87, %105 : vector<32x8xi32>
    %107 = arith.extui %106 : vector<32x8xi1> to vector<32x8xi32>
    %108 = arith.sitofp %107 : vector<32x8xi32> to vector<32x8xf32>
    %109 = arith.truncf %108 : vector<32x8xf32> to vector<32x8xbf16>
    %110 = arith.subf %102, %109 : vector<32x8xbf16>
    %111 = arith.truncf %85 : vector<8x32xf32> to vector<8x32xbf16>
    %cst_28 = arith.constant dense<0.000000e+00> : vector<32x32xf32>
    %112 = tpu.matmul %110, %111, %cst_28 {dimension_numbers = #tpu.dot_dimension_numbers<[1], [0], [0], [1], [0, 0, 1, 1], [], []>} : vector<32x8xbf16>, vector<8x32xbf16>, vector<32x32xf32> -> vector<32x32xf32>
    %cst_29 = arith.constant dense<0.000000e+00> : vector<32x8xf32>
    %113 = tpu.matmul %112, %2, %cst_29 {dimension_numbers = #tpu.dot_dimension_numbers<[1], [0], [0], [1], [0, 0, 1, 1], [], []>} : vector<32x32xf32>, vector<32x8xf32>, vector<32x8xf32> -> vector<32x8xf32>
    %114 = vector.broadcast %7 : vector<1x8xf32> to vector<32x8xf32>
    %115 = arith.addf %113, %114 : vector<32x8xf32>
    %cst_30 = arith.constant 0.000000e+00 : f32
    %116 = vector.broadcast %cst_30 : f32 to vector<32x8xf32>
    %117 = arith.maximumf %115, %116 : vector<32x8xf32>
    %cst_31 = arith.constant dense<0.000000e+00> : vector<32x128xf32>
    %118 = tpu.matmul %117, %3, %cst_31 {dimension_numbers = #tpu.dot_dimension_numbers<[1], [0], [0], [1], [0, 0, 1, 1], [], []>} : vector<32x8xf32>, vector<8x128xf32>, vector<32x128xf32> -> vector<32x128xf32>
    %119 = vector.broadcast %8 : vector<1x128xf32> to vector<32x128xf32>
    %120 = arith.addf %118, %119 : vector<32x128xf32>
    %c0_32 = arith.constant 0 : index
    %c0_33 = arith.constant 0 : index
    %121 = vector.load %arg3[%c0_32, %c0_33] : memref<32x128xf32, #tpu.memory_space<vmem>>, vector<32x128xf32>
    tpu.vector_store %arg3[%c0_32, %c0_33], %120 {strides = array<i32>} : memref<32x128xf32, #tpu.memory_space<vmem>>, vector<32x128xf32>,
    return
  }
}

</mosaic_0001>

<llo_original>
// kernel: grapher_forward.1
$region0: #{grapher_forward.1}
  #allocation0 [shape = 'u32[]', space=smem, size = 0x4, offset = 0x4, fixed_abs, tag = 'smem constant byte address 0x4 - core index']
  #allocation1 [shape = 'u32[144,128]{1,0:T(1,128)}', space=vmem, size = 0x12000, scoped, tag = 'internal scratch']
  %s0 = inlined_call_operand.vmem [shape: s32[32,1], index: 0, kind: input, shape index: {}]
  %s1 = inlined_call_operand.hbm [shape: f32[112,128], index: 1, kind: input, shape index: {}]
  %s2 = inlined_call_operand.hbm [shape: f32[32,128], index: 2, kind: output, shape index: {0}]
  %s3 = inlined_call_operand.hbm [shape: f32[32,128], index: 3, kind: output, shape index: {1}]
  %4 = xla_tuple %s2, %s3
  %s5 = sld [smem:[#allocation0]]
  $region30: #{grapher_forward.1} parent=0
    _
  %s7 = ssub.s32 1, %s5
  %s8 = scalar_select 0, %s7, %s5
  $region1: #{grapher_forward.1} parent=0
    #allocation2 [shape = 'u8[57344]{0}', space=vmem, size = 0xe000, scoped, tag = 'input window, operand 1, single buffered']
    #allocation3 [shape = 's32[1]{0}', space=sflag, size = 0x4, scoped, tag = 'scoped memory for grapher_forward.1']
    #allocation4 [shape = 's32[1]{0}', space=sflag, size = 0x4, scoped, tag = 'scoped memory for grapher_forward.1']
    #allocation5 [shape = 'u8[16384]{0}', space=vmem, size = 0x4000, scoped, tag = 'output window, operand 0, single buffered']
    #allocation6 [shape = 'u8[16384]{0}', space=vmem, size = 0x4000, scoped, tag = 'output window, operand 1, single buffered']
    #allocation7 [shape = 's32[1]{0}', space=sflag, size = 0x4, scoped, tag = 'scoped memory for grapher_forward.1']
    %9 = vsyncpa [#allocation3], 0
    %10 = vsyncpa [#allocation4], 0
    %11 = vsyncpa [#allocation7], 0
    // Predicated region
    $region2: #{grapher_forward.1} parent=1 // pred_check
      _
    $region3: #{grapher_forward.1} parent=1 // pred_check_branch
      %13 = sbr.rel (0) target = $region5
    $region4: #{grapher_forward.1} parent=1 // pred_region
      _
    $region5: #{grapher_forward.1} parent=1 // pred_fallthru
      _
    // Predicated region
    $region6: #{grapher_forward.1} parent=1 // pred_check
      _
    $region7: #{grapher_forward.1} parent=1 // pred_check_branch
      %15 = sbr.rel (0) target = $region9
    $region8: #{grapher_forward.1} parent=1 // pred_region
      %s17 = ssub.s32 1792, 1792
      %18 = vsyncadd [#allocation3], %s17
      %s19 = sshll.u32 [#allocation2], 4
      %s20 = int_to_ptr.vmem [resolvable:$true] %s19
      %25 = dma.hbm_to_vmem [thread:$0]  %s1, 1792, %s20, [#allocation3], 128, 128, 8
    $region9: #{grapher_forward.1} parent=1 // pred_fallthru
      _
    // Predicated region
    $region10: #{grapher_forward.1} parent=1 // pred_check
      _
    $region11: #{grapher_forward.1} parent=1 // pred_check_branch
      %27 = sbr.rel (0) target = $region13
    $region12: #{grapher_forward.1} parent=1 // pred_region
      %28 = dma.done [#allocation3], 1792
    $region13: #{grapher_forward.1} parent=1 // pred_fallthru
      _
    %v30 = vld [vmem:[#allocation2] sm:$0xff]
    %v31 = vld [vmem:[#allocation2 + $0x8] sm:$0xff]
    %v32 = vld [vmem:[#allocation2 + $0x10] sm:$0xff]
    %v33 = vld [vmem:[#allocation2 + $0x18] sm:$0xff]
    %v34 = vld [vmem:[#allocation2 + $0x20] sm:$0xff]
    %v35 = vld [vmem:[#allocation2 + $0x28] sm:$0xff]
    %v36 = vld [vmem:[#allocation2 + $0x30] sm:$0xff]
    %v37 = vld [vmem:[#allocation2 + $0x38] sm:$0xff]
    %v38 = vld [vmem:[#allocation2 + $0x40] sm:$0xff]
    %v39 = vld [vmem:[#allocation2 + $0x48] sm:$0xff]
    %v40 = vld [vmem:[#allocation2 + $0x50] sm:$0xff]
    %v41 = vld [vmem:[#allocation2 + $0x58] sm:$0xff]
    %v42 = vld [vmem:[#allocation2 + $0x60] sm:$0xff]
    %v43 = vld [vmem:[#allocation2 + $0x68] sm:$0xff]
    %v44 = vld [vmem:[%s0] sm:$0xff]
    %v45 = vld [vmem:[%s0 + $0x8] sm:$0xff]
    %v46 = vld [vmem:[%s0 + $0x10] sm:$0xff]
    %v47 = vld [vmem:[%s0 + $0x18] sm:$0xff]
    %v48 = vlaneseq
    %v49 = vand.u32 %v48, 127
    %50 = vset.pattern.permute.xlu0 0
    %51 = vperm.xlu0 %50, %v44
    %v52 = vpop.permute.xlu0 %51
    %53 = vset.pattern.permute.xlu0 0
    %54 = vperm.xlu0 %53, %v45
    %v55 = vpop.permute.xlu0 %54
    %56 = vset.pattern.permute.xlu0 0
    %57 = vperm.xlu0 %56, %v46
    %v58 = vpop.permute.xlu0 %57
    %59 = vset.pattern.permute.xlu0 0
    %60 = vperm.xlu0 %59, %v47
    %v61 = vpop.permute.xlu0 %60
    %vm62 = vcmp.eq.s32.totalorder %v49, %v52
    %vm63 = vcmp.eq.s32.totalorder %v49, %v55
    %vm64 = vcmp.eq.s32.totalorder %v49, %v58
    %vm65 = vcmp.eq.s32.totalorder %v49, %v61
    %v66 = vsel %vm62, 1, 0
    %v67 = vsel %vm63, 1, 0
    %v68 = vsel %vm64, 1, 0
    %v69 = vsel %vm65, 1, 0
    %v70 = vcvt.s32.f32 %v66
    %v71 = vcvt.s32.f32 %v67
    %v72 = vcvt.s32.f32 %v68
    %v73 = vcvt.s32.f32 %v69
    %v74 = vlaneseq
    %v75 = vshrl.u32 %v74, 7
    %v76 = vsub.s32 0, %v75
    %v77 = vrot.slane %v43, %v76
    %vm78 = vcmask 261120
    %v80 = vsel %vm78, %v70, 0
    %v83 = vsel %vm78, %v71, 0
    %v86 = vsel %vm78, %v72, 0
    %v89 = vsel %vm78, %v73, 0
    %91 = vmatprep.subr.mxu0 0.0
    %92 = vmatpush1.msra.mxu0 %v30
    %93 = vmatprep.subr.mxu0 0.0
    %94 = vmatpush1.msra.mxu0 %v31
    %95 = vmatprep.subr.mxu0 0.0
    %96 = vmatpush1.msra.mxu0 %v32
    %97 = vmatprep.subr.mxu0 0.0
    %98 = vmatpush1.msra.mxu0 %v33
    %99 = vmatprep.subr.mxu0 0.0
    %100 = vmatpush1.msra.mxu0 0.0
    %101 = vmatprep.subr.mxu0 0.0
    %102 = vmatpush1.msra.mxu0 0.0
    %103 = vmatprep.subr.mxu0 0.0
    %104 = vmatpush1.msra.mxu0 0.0
    %105 = vmatprep.subr.mxu0 0.0
    %106 = vmatpush1.msra.mxu0 0.0
    %107 = vmatprep.subr.mxu0 0.0
    %108 = vmatpush1.msra.mxu0 0.0
    %109 = vmatprep.subr.mxu0 0.0
    %110 = vmatpush1.msra.mxu0 0.0
    %111 = vmatprep.subr.mxu0 0.0
    %112 = vmatpush1.msra.mxu0 0.0
    %113 = vmatprep.subr.mxu0 0.0
    %114 = vmatpush1.msra.mxu0 0.0
    %115 = vmatprep.subr.mxu0 0.0
    %116 = vmatpush1.msra.mxu0 0.0
    %117 = vmatprep.subr.mxu0 0.0
    %118 = vmatpush1.msra.mxu0 0.0
    %119 = vmatprep.subr.mxu0 0.0
    %120 = vmatpush1.msra.mxu0 0.0
    %121 = vmatprep.subr.mxu0 0.0
    %122 = vmatpush1.msra.mxu0 0.0
    %123 = vmatprep.subr.mxu0 0.0
    %124 = vmatpush1.msra.mxu0 0.0
    %125 = vmatprep.subr.mxu0 0.0
    %126 = vmatpush1.msra.mxu0 0.0
    %127 = vmatprep.subr.mxu0 0.0
    %128 = vmatpush1.msra.mxu0 0.0
    %129 = vmatprep.subr.mxu0 0.0
    %130 = vmatpush1.msra.mxu0 0.0
    %131 = vmatprep.subr.mxu0 0.0
    %132 = vmatpush1.msra.mxu0 0.0
    %133 = vmatprep.subr.mxu0 0.0
    %134 = vmatpush1.msra.mxu0 0.0
    %135 = vmatprep.subr.mxu0 0.0
    %136 = vmatpush1.msra.mxu0 0.0
    %137 = vmatprep.subr.mxu0 0.0
    %138 = vmatpush1.msra.mxu0 0.0
    %139 = vmatprep.subr.mxu0 0.0
    %140 = vmatpush1.msra.mxu0 0.0
    %141 = vmatprep.subr.mxu0 0.0
    %142 = vmatpush1.msra.mxu0 0.0
    %143 = vmatprep.subr.mxu0 0.0
    %144 = vmatpush1.msra.mxu0 0.0
    %145 = vmatprep.subr.mxu0 0.0
    %146 = vmatpush1.msra.mxu0 0.0
    %147 = vmatprep.subr.mxu0 0.0
    %148 = vmatpush1.msra.mxu0 0.0
    %149 = vmatprep.subr.mxu0 0.0
    %150 = vmatpush1.msra.mxu0 0.0
    %151 = vmatprep.subr.mxu0 0.0
    %152 = vmatpush1.msra.mxu0 0.0
    %153 = vmatprep.subr.mxu0 0.0
    %154 = vmatpush1.msra.mxu0 0.0
    %155 = vmatprep.mubr.f32.mxu0 0.0
    %156 = vmatmul.mubr.f32.gmra.mrb[0].mxu0 %v80
    %v157 = vpop.f32.mrb[0].mxu0
    %v158 = vadd.f32 %v77, %v157
    %v159 = vpop.f32.mrb[0].mxu0
    %160 = vmatprep.mubr.f32.mxu0 0.0
    %161 = vmatmul.mubr.f32.gmra.mrb[0].mxu0 %v83
    %v162 = vpop.f32.mrb[0].mxu0
    %v163 = vadd.f32 %v77, %v162
    %v164 = vpop.f32.mrb[0].mxu0
    %165 = vmatprep.mubr.f32.mxu0 0.0
    %166 = vmatmul.mubr.f32.gmra.mrb[0].mxu0 %v86
    %v167 = vpop.f32.mrb[0].mxu0
    %v168 = vadd.f32 %v77, %v167
    %v169 = vpop.f32.mrb[0].mxu0
    %170 = vmatprep.mubr.f32.mxu0 0.0
    %171 = vmatmul.mubr.f32.gmra.mrb[0].mxu0 %v89
    %v172 = vpop.f32.mrb[0].mxu0
    %v173 = vadd.f32 %v77, %v172
    %v174 = vpop.f32.mrb[0].mxu0
    %175 = vdwg.mxu0
    %v176 = vtanh.pop %v158
    %v177 = vtanh.pop %v163
    %v178 = vtanh.pop %v168
    %v179 = vtanh.pop %v173
    %v180 = vlaneseq
    %v181 = vshrl.u32 %v180, 7
    %v182 = vsub.s32 1, %v181
    %v183 = vrot.slane %v43, %v182
    %v185 = vsel %vm78, %v176, 0
    %v188 = vsel %vm78, %v177, 0
    %v191 = vsel %vm78, %v178, 0
    %v194 = vsel %vm78, %v179, 0
    %196 = vmatprep.subr.mxu0 0.0
    %197 = vmatpush1.msra.mxu0 %v34
    %198 = vmatprep.subr.mxu0 0.0
    %199 = vmatpush1.msra.mxu0 %v35
    %200 = vmatprep.subr.mxu0 0.0
    %201 = vmatpush1.msra.mxu0 %v36
    %202 = vmatprep.subr.mxu0 0.0
    %203 = vmatpush1.msra.mxu0 %v37
    %204 = vmatprep.subr.mxu0 0.0
    %205 = vmatpush1.msra.mxu0 0.0
    %206 = vmatprep.subr.mxu0 0.0
    %207 = vmatpush1.msra.mxu0 0.0
    %208 = vmatprep.subr.mxu0 0.0
    %209 = vmatpush1.msra.mxu0 0.0
    %210 = vmatprep.subr.mxu0 0.0
    %211 = vmatpush1.msra.mxu0 0.0
    %212 = vmatprep.subr.mxu0 0.0
    %213 = vmatpush1.msra.mxu0 0.0
    %214 = vmatprep.subr.mxu0 0.0
    %215 = vmatpush1.msra.mxu0 0.0
    %216 = vmatprep.subr.mxu0 0.0
    %217 = vmatpush1.msra.mxu0 0.0
    %218 = vmatprep.subr.mxu0 0.0
    %219 = vmatpush1.msra.mxu0 0.0
    %220 = vmatprep.subr.mxu0 0.0
    %221 = vmatpush1.msra.mxu0 0.0
    %222 = vmatprep.subr.mxu0 0.0
    %223 = vmatpush1.msra.mxu0 0.0
    %224 = vmatprep.subr.mxu0 0.0
    %225 = vmatpush1.msra.mxu0 0.0
    %226 = vmatprep.subr.mxu0 0.0
    %227 = vmatpush1.msra.mxu0 0.0
    %228 = vmatprep.subr.mxu0 0.0
    %229 = vmatpush1.msra.mxu0 0.0
    %230 = vmatprep.subr.mxu0 0.0
    %231 = vmatpush1.msra.mxu0 0.0
    %232 = vmatprep.subr.mxu0 0.0
    %233 = vmatpush1.msra.mxu0 0.0
    %234 = vmatprep.subr.mxu0 0.0
    %235 = vmatpush1.msra.mxu0 0.0
    %236 = vmatprep.subr.mxu0 0.0
    %237 = vmatpush1.msra.mxu0 0.0
    %238 = vmatprep.subr.mxu0 0.0
    %239 = vmatpush1.msra.mxu0 0.0
    %240 = vmatprep.subr.mxu0 0.0
    %241 = vmatpush1.msra.mxu0 0.0
    %242 = vmatprep.subr.mxu0 0.0
    %243 = vmatpush1.msra.mxu0 0.0
    %244 = vmatprep.subr.mxu0 0.0
    %245 = vmatpush1.msra.mxu0 0.0
    %246 = vmatprep.subr.mxu0 0.0
    %247 = vmatpush1.msra.mxu0 0.0
    %248 = vmatprep.subr.mxu0 0.0
    %249 = vmatpush1.msra.mxu0 0.0
    %250 = vmatprep.subr.mxu0 0.0
    %251 = vmatpush1.msra.mxu0 0.0
    %252 = vmatprep.subr.mxu0 0.0
    %253 = vmatpush1.msra.mxu0 0.0
    %254 = vmatprep.subr.mxu0 0.0
    %255 = vmatpush1.msra.mxu0 0.0
    %256 = vmatprep.subr.mxu0 0.0
    %257 = vmatpush1.msra.mxu0 0.0
    %258 = vmatprep.subr.mxu0 0.0
    %259 = vmatpush1.msra.mxu0 0.0
    %260 = vmatprep.mubr.f32.mxu0 0.0
    %261 = vmatmul.mubr.f32.gmra.mrb[0].mxu0 %v185
    %v262 = vpop.f32.mrb[0].mxu0
    %v263 = vadd.f32 %v183, %v262
    %v264 = vpop.f32.mrb[0].mxu0
    %265 = vmatprep.mubr.f32.mxu0 0.0
    %266 = vmatmul.mubr.f32.gmra.mrb[0].mxu0 %v188
    %v267 = vpop.f32.mrb[0].mxu0
    %v268 = vadd.f32 %v183, %v267
    %v269 = vpop.f32.mrb[0].mxu0
    %270 = vmatprep.mubr.f32.mxu0 0.0
    %271 = vmatmul.mubr.f32.gmra.mrb[0].mxu0 %v191
    %v272 = vpop.f32.mrb[0].mxu0
    %v273 = vadd.f32 %v183, %v272
    %v274 = vpop.f32.mrb[0].mxu0
    %275 = vmatprep.mubr.f32.mxu0 0.0
    %276 = vmatmul.mubr.f32.gmra.mrb[0].mxu0 %v194
    %v277 = vpop.f32.mrb[0].mxu0
    %v278 = vadd.f32 %v183, %v277
    %v279 = vpop.f32.mrb[0].mxu0
    %280 = vdwg.mxu0
    %281 = vst [vmem:[#allocation5] sm:$0xff] %v263
    %282 = vst [vmem:[#allocation5 + $0x8] sm:$0xff] %v268
    %283 = vst [vmem:[#allocation5 + $0x10] sm:$0xff] %v273
    %284 = vst [vmem:[#allocation5 + $0x18] sm:$0xff] %v278
    %285 = vmax.xlane.f32.xlu0 %v263
    %v286 = vpop.xlane.xlu0 %285
    %287 = vmax.xlane.f32.xlu0 %v268
    %v288 = vpop.xlane.xlu0 %287
    %289 = vmax.xlane.f32.xlu0 %v273
    %v290 = vpop.xlane.xlu0 %289
    %291 = vmax.xlane.f32.xlu0 %v278
    %v292 = vpop.xlane.xlu0 %291
    %vm293 = vcmp.eq.f32.partialorder %v263, %v286
    %vm294 = vcmp.eq.f32.partialorder %v268, %v288
    %vm295 = vcmp.eq.f32.partialorder %v273, %v290
    %vm296 = vcmp.eq.f32.partialorder %v278, %v292
    %v297 = vsel %vm293, %v49, 128
    %v298 = vsel %vm294, %v49, 128
    %v299 = vsel %vm295, %v49, 128
    %v300 = vsel %vm296, %v49, 128
    %v301 = vand.u32 %v297, 65535
    %v302 = vshra.s32 %v297, 16
    %v303 = vcvt.s32.f32 %v301
    %v304 = vcvt.s32.f32 %v302
    %305 = vmin.xlane.f32.xlu0 %v304
    %v306 = vpop.xlane.xlu0 %305
    %vm307 = vcmp.eq.f32.partialorder %v304, %v306
    %v308 = vsel %vm307, %v303, inf
    %309 = vmin.xlane.f32.xlu0 %v308
    %v310 = vpop.xlane.xlu0 %309
    %v311 = vcvt.f32.s32 %v310
    %v312 = vcvt.f32.s32 %v306
    %v313 = vshll.u32 %v312, 16
    %v314 = vadd.s32 %v313, %v311
    %v315 = vand.u32 %v298, 65535
    %v316 = vshra.s32 %v298, 16
    %v317 = vcvt.s32.f32 %v315
    %v318 = vcvt.s32.f32 %v316
    %319 = vmin.xlane.f32.xlu0 %v318
    %v320 = vpop.xlane.xlu0 %319
    %vm321 = vcmp.eq.f32.partialorder %v318, %v320
    %v322 = vsel %vm321, %v317, inf
    %323 = vmin.xlane.f32.xlu0 %v322
    %v324 = vpop.xlane.xlu0 %323
    %v325 = vcvt.f32.s32 %v324
    %v326 = vcvt.f32.s32 %v320
    %v327 = vshll.u32 %v326, 16
    %v328 = vadd.s32 %v327, %v325
    %v329 = vand.u32 %v299, 65535
    %v330 = vshra.s32 %v299, 16
    %v331 = vcvt.s32.f32 %v329
    %v332 = vcvt.s32.f32 %v330
    %333 = vmin.xlane.f32.xlu0 %v332
    %v334 = vpop.xlane.xlu0 %333
    %vm335 = vcmp.eq.f32.partialorder %v332, %v334
    %v336 = vsel %vm335, %v331, inf
    %337 = vmin.xlane.f32.xlu0 %v336
    %v338 = vpop.xlane.xlu0 %337
    %v339 = vcvt.f32.s32 %v338
    %v340 = vcvt.f32.s32 %v334
    %v341 = vshll.u32 %v340, 16
    %v342 = vadd.s32 %v341, %v339
    %v343 = vand.u32 %v300, 65535
    %v344 = vshra.s32 %v300, 16
    %v345 = vcvt.s32.f32 %v343
    %v346 = vcvt.s32.f32 %v344
    %347 = vmin.xlane.f32.xlu0 %v346
    %v348 = vpop.xlane.xlu0 %347
    %vm349 = vcmp.eq.f32.partialorder %v346, %v348
    %v350 = vsel %vm349, %v345, inf
    %351 = vmin.xlane.f32.xlu0 %v350
    %v352 = vpop.xlane.xlu0 %351
    %v353 = vcvt.f32.s32 %v352
    %v354 = vcvt.f32.s32 %v348
    %v355 = vshll.u32 %v354, 16
    %v356 = vadd.s32 %v355, %v353
    %vm357 = vcmp.eq.s32.totalorder %v314, 3
    %vm358 = vcmp.eq.s32.totalorder %v328, 3
    %vm359 = vcmp.eq.s32.totalorder %v342, 3
    %vm360 = vcmp.eq.s32.totalorder %v356, 3
    %v361 = vsel %vm357, 1, 0
    %v362 = vsel %vm358, 1, 0
    %v363 = vsel %vm359, 1, 0
    %v364 = vsel %vm360, 1, 0
    %v365 = vcvt.s32.f32 %v361
    %v366 = vcvt.s32.f32 %v362
    %v367 = vcvt.s32.f32 %v363
    %v368 = vcvt.s32.f32 %v364
    %v369 = vlaneseq
    %v370 = vshrl.u32 %v369, 7
    %v371 = vadd.s32 %v370, 8
    %v372 = vadd.s32 %v370, 16
    %v373 = vadd.s32 %v370, 24
    %v374 = vshra.s32 %v370, 4
    %v375 = vshra.s32 %v371, 4
    %v376 = vshra.s32 %v372, 4
    %v377 = vshra.s32 %v373, 4
    %v378 = vshra.s32 %v49, 4
    %vm379 = vcmp.eq.s32.totalorder %v374, %v378
    %vm380 = vcmp.eq.s32.totalorder %v375, %v378
    %vm381 = vcmp.eq.s32.totalorder %v376, %v378
    %vm382 = vcmp.eq.s32.totalorder %v377, %v378
    %vm383 = vcmp.le.s32.totalorder %v370, %v49
    %vm384 = vcmp.le.s32.totalorder %v371, %v49
    %vm385 = vcmp.le.s32.totalorder %v372, %v49
    %vm386 = vcmp.le.s32.totalorder %v373, %v49
    %vm387 = vmand %vm383, %vm379
    %vm388 = vmand %vm384, %vm380
    %vm389 = vmand %vm385, %vm381
    %vm390 = vmand %vm386, %vm382
    %v391 = vsel %vm387, %v365, 0.0
    %v392 = vsel %vm388, %v366, 0.0
    %v393 = vsel %vm389, %v367, 0.0
    %v394 = vsel %vm390, %v368, 0.0
    %v395 = vsel %vm78, %v391, 0.0
    %v396 = vsel %vm78, %v392, 0.0
    %v397 = vadd.f32 %v395, %v396
    %v398 = vsel %vm78, %v393, 0.0
    %v399 = vadd.f32 %v397, %v398
    %v400 = vsel %vm78, %v394, 0.0
    %v401 = vadd.f32 %v399, %v400
    %v402 = vrot.slane %v401, 4
    %v403 = vadd.f32 %v401, %v402
    %v404 = vrot.slane %v403, 2
    %v405 = vadd.f32 %v403, %v404
    %v406 = vrot.slane %v405, 1
    %v407 = vadd.f32 %v405, %v406
    %vm408 = vcmp.eq.s32.totalorder %v370, %v49
    %vm409 = vcmp.eq.s32.totalorder %v371, %v49
    %vm410 = vcmp.eq.s32.totalorder %v372, %v49
    %vm411 = vcmp.eq.s32.totalorder %v373, %v49
    %v412 = vsel %vm408, %v365, 0.0
    %v413 = vsel %vm409, %v366, 0.0
    %v414 = vsel %vm410, %v367, 0.0
    %v415 = vsel %vm411, %v368, 0.0
    %v416 = vsel %vm78, %v412, 0.0
    %v417 = vsel %vm78, %v413, 0.0
    %v418 = vadd.f32 %v416, %v417
    %v419 = vsel %vm78, %v414, 0.0
    %v420 = vadd.f32 %v418, %v419
    %v421 = vsel %vm78, %v415, 0.0
    %v422 = vadd.f32 %v420, %v421
    %v423 = vrot.slane %v422, 4
    %v424 = vadd.f32 %v422, %v423
    %v425 = vrot.slane %v424, 2
    %v426 = vadd.f32 %v424, %v425
    %v427 = vrot.slane %v426, 1
    %v428 = vadd.f32 %v426, %v427
    %vm429 = vcmp.gt.f32.partialorder %v428, 0.5
    %v430 = vcvt.f32.s32.to.zero.pseudo %v407
    %v431 = vsel %vm429, 4294967295, %v430
    %v432 = vand.u32 %v370, 3
    %vm433 = vcmp.eq.s32.totalorder %v431, %v432
    %v434 = vshra.s32 %v370, 2
    %vm435 = vcmp.eq.s32.totalorder %v378, %v434
    %vm436 = vmand %vm433, %vm435
    %v437 = vsel %vm436, 1, 0
    %v438 = vcvt.s32.f32 %v437
    %v439 = vsel %vm78, %v438, 0.0
    %440 = vadd.xlane.f32.xlu0 %v439
    %v441 = vpop.xlane.xlu0 %440
    %v442 = vmax.f32 %v441, 1.0
    %v443 = vpack.c.bf16 %v438, %v438
    %v444 = vpack.c.bf16 %v177, %v176
    %v445 = vpack.c.bf16 %v179, %v178
    %v447 = vsel %vm78, %v443, 0
    %449 = vmatprep.subr.bf16.mxu0 0
    %450 = vmatpush1.bf16.msra.mxu0 %v444
    %451 = vmatprep.subr.bf16.mxu0 0
    %452 = vmatpush1.bf16.msra.mxu0 %v445
    %453 = vmatprep.subr.bf16.mxu0 0
    %454 = vmatpush1.bf16.msra.mxu0 0
    %455 = vmatprep.subr.bf16.mxu0 0
    %456 = vmatpush1.bf16.msra.mxu0 0
    %457 = vmatprep.subr.bf16.mxu0 0
    %458 = vmatpush1.bf16.msra.mxu0 0
    %459 = vmatprep.subr.bf16.mxu0 0
    %460 = vmatpush1.bf16.msra.mxu0 0
    %461 = vmatprep.subr.bf16.mxu0 0
    %462 = vmatpush1.bf16.msra.mxu0 0
    %463 = vmatprep.subr.bf16.mxu0 0
    %464 = vmatpush1.bf16.msra.mxu0 0
    %465 = vmatprep.subr.bf16.mxu0 0
    %466 = vmatpush1.bf16.msra.mxu0 0
    %467 = vmatprep.subr.bf16.mxu0 0
    %468 = vmatpush1.bf16.msra.mxu0 0
    %469 = vmatprep.subr.bf16.mxu0 0
    %470 = vmatpush1.bf16.msra.mxu0 0
    %471 = vmatprep.subr.bf16.mxu0 0
    %472 = vmatpush1.bf16.msra.mxu0 0
    %473 = vmatprep.subr.bf16.mxu0 0
    %474 = vmatpush1.bf16.msra.mxu0 0
    %475 = vmatprep.subr.bf16.mxu0 0
    %476 = vmatpush1.bf16.msra.mxu0 0
    %477 = vmatprep.subr.bf16.mxu0 0
    %478 = vmatpush1.bf16.msra.mxu0 0
    %479 = vmatprep.subr.bf16.mxu0 0
    %480 = vmatpush1.bf16.msra.mxu0 0
    %481 = vmatprep.mubr.bf16.mxu0 0
    %482 = vmatmul.mubr.bf16.gmra.mrb[0].mxu0 %v447
    %v483 = vpop.f32.mrb[0].mxu0
    %v484 = vadd.f32 0.0, %v483
    %v485 = vpop.f32.mrb[0].mxu0
    %v486 = vpop.f32.mrb[0].mxu0
    %v487 = vpop.f32.mrb[0].mxu0
    %488 = vdwg.mxu0
    %v489 = vrcp.pop %v442
    %v490 = vmul.f32 %v484, %v489
    %v491 = vshra.s32 %v370, 3
    %v492 = vshra.s32 %v371, 3
    %v493 = vshra.s32 %v372, 3
    %v494 = vshra.s32 %v373, 3
    %v495 = vshra.s32 %v370, 1
    %v496 = vshra.s32 %v371, 1
    %v497 = vshra.s32 %v372, 1
    %v498 = vshra.s32 %v373, 1
    %v499 = vand.u32 %v495, 3
    %v500 = vand.u32 %v496, 3
    %v501 = vand.u32 %v497, 3
    %v502 = vand.u32 %v498, 3
    %v503 = vand.u32 %v370, 1
    %v504 = vand.u32 %v371, 1
    %v505 = vand.u32 %v372, 1
    %v506 = vand.u32 %v373, 1
    %v507 = vmul.u32 %v503, 4
    %v508 = vmul.u32 %v504, 4
    %v509 = vmul.u32 %v505, 4
    %v510 = vmul.u32 %v506, 4
    %v511 = vadd.s32 %v507, %v491
    %v512 = vadd.s32 %v508, %v492
    %v513 = vadd.s32 %v509, %v493
    %v514 = vadd.s32 %v510, %v494
    %vm515 = vcmp.eq.s32.totalorder %v49, %v511
    %vm516 = vcmp.eq.s32.totalorder %v49, %v512
    %vm517 = vcmp.eq.s32.totalorder %v49, %v513
    %vm518 = vcmp.eq.s32.totalorder %v49, %v514
    %v519 = vsel %vm515, 1, 0
    %v520 = vsel %vm516, 1, 0
    %v521 = vsel %vm517, 1, 0
    %v522 = vsel %vm518, 1, 0
    %v523 = vcvt.s32.f32 %v519
    %v524 = vcvt.s32.f32 %v520
    %v525 = vcvt.s32.f32 %v521
    %v526 = vcvt.s32.f32 %v522
    %v527 = vpack.c.bf16 %v524, %v523
    %v528 = vpack.c.bf16 %v526, %v525
    %v529 = vadd.s32 %v507, %v499
    %v530 = vadd.s32 %v508, %v500
    %v531 = vadd.s32 %v509, %v501
    %v532 = vadd.s32 %v510, %v502
    %vm533 = vcmp.eq.s32.totalorder %v49, %v529
    %vm534 = vcmp.eq.s32.totalorder %v49, %v530
    %vm535 = vcmp.eq.s32.totalorder %v49, %v531
    %vm536 = vcmp.eq.s32.totalorder %v49, %v532
    %v537 = vsel %vm533, 1, 0
    %v538 = vsel %vm534, 1, 0
    %v539 = vsel %vm535, 1, 0
    %v540 = vsel %vm536, 1, 0
    %v541 = vcvt.s32.f32 %v537
    %v542 = vcvt.s32.f32 %v538
    %v543 = vcvt.s32.f32 %v539
    %v544 = vcvt.s32.f32 %v540
    %v545 = vpack.c.bf16 %v542, %v541
    %v546 = vpack.c.bf16 %v544, %v543
    %v547 = vsub.bf16 %v527, %v545
    %v548 = vsub.bf16 %v528, %v546
    %v549 = vpack.c.bf16 %v490, %v490
    %vm550 = vcmask 64512
    %v552 = vsel %vm550, %v547, 0
    %v555 = vsel %vm550, %v548, 0
    %vm557 = vcmask 1043456
    %v559 = vsel %vm557, %v549, 0
    %561 = vmatprep.subr.bf16.mxu0 0
    %562 = vmatpush1.bf16.msra.mxu0 %v559
    %563 = vmatprep.subr.bf16.mxu0 0
    %564 = vmatpush1.bf16.msra.mxu0 0
    %565 = vmatprep.subr.bf16.mxu0 0
    %566 = vmatpush1.bf16.msra.mxu0 0
    %567 = vmatprep.subr.bf16.mxu0 0
    %568 = vmatpush1.bf16.msra.mxu0 0
    %569 = vmatprep.subr.bf16.mxu0 0
    %570 = vmatpush1.bf16.msra.mxu0 0
    %571 = vmatprep.subr.bf16.mxu0 0
    %572 = vmatpush1.bf16.msra.mxu0 0
    %573 = vmatprep.subr.bf16.mxu0 0
    %574 = vmatpush1.bf16.msra.mxu0 0
    %575 = vmatprep.subr.bf16.mxu0 0
    %576 = vmatpush1.bf16.msra.mxu0 0
    %577 = vmatprep.subr.bf16.mxu0 0
    %578 = vmatpush1.bf16.msra.mxu0 0
    %579 = vmatprep.subr.bf16.mxu0 0
    %580 = vmatpush1.bf16.msra.mxu0 0
    %581 = vmatprep.subr.bf16.mxu0 0
    %582 = vmatpush1.bf16.msra.mxu0 0
    %583 = vmatprep.subr.bf16.mxu0 0
    %584 = vmatpush1.bf16.msra.mxu0 0
    %585 = vmatprep.subr.bf16.mxu0 0
    %586 = vmatpush1.bf16.msra.mxu0 0
    %587 = vmatprep.subr.bf16.mxu0 0
    %588 = vmatpush1.bf16.msra.mxu0 0
    %589 = vmatprep.subr.bf16.mxu0 0
    %590 = vmatpush1.bf16.msra.mxu0 0
    %591 = vmatprep.subr.bf16.mxu0 0
    %592 = vmatpush1.bf16.msra.mxu0 0
    %593 = vmatprep.mubr.bf16.mxu0 0
    %594 = vmatmul.mubr.bf16.gmra.mrb[0].mxu0 %v552
    %v595 = vpop.f32.mrb[0].mxu0
    %v596 = vadd.f32 0.0, %v595
    %v597 = vpop.f32.mrb[0].mxu0
    %v598 = vpop.f32.mrb[0].mxu0
    %v599 = vadd.f32 0.0, %v598
    %v600 = vpop.f32.mrb[0].mxu0
    %601 = vmatprep.mubr.bf16.mxu0 0
    %602 = vmatmul.mubr.bf16.gmra.mrb[0].mxu0 %v555
    %v603 = vpop.f32.mrb[0].mxu0
    %v604 = vadd.f32 0.0, %v603
    %v605 = vpop.f32.mrb[0].mxu0
    %v606 = vpop.f32.mrb[0].mxu0
    %v607 = vadd.f32 0.0, %v606
    %v608 = vpop.f32.mrb[0].mxu0
    %609 = vdwg.mxu0
    %v610 = vlaneseq
    %v611 = vshrl.u32 %v610, 7
    %v612 = vsub.s32 2, %v611
    %v613 = vrot.slane %v43, %v612
    %v615 = vsel %vm78, %v596, 0
    %v618 = vsel %vm78, %v599, 0
    %v621 = vsel %vm78, %v604, 0
    %v624 = vsel %vm78, %v607, 0
    %626 = vmatprep.subr.mxu0 0.0
    %627 = vmatpush1.msra.mxu0 %v38
    %628 = vmatprep.subr.mxu0 0.0
    %629 = vmatpush1.msra.mxu0 %v39
    %630 = vmatprep.subr.mxu0 0.0
    %631 = vmatpush1.msra.mxu0 %v40
    %632 = vmatprep.subr.mxu0 0.0
    %633 = vmatpush1.msra.mxu0 %v41
    %634 = vmatprep.subr.mxu0 0.0
    %635 = vmatpush1.msra.mxu0 0.0
    %636 = vmatprep.subr.mxu0 0.0
    %637 = vmatpush1.msra.mxu0 0.0
    %638 = vmatprep.subr.mxu0 0.0
    %639 = vmatpush1.msra.mxu0 0.0
    %640 = vmatprep.subr.mxu0 0.0
    %641 = vmatpush1.msra.mxu0 0.0
    %642 = vmatprep.subr.mxu0 0.0
    %643 = vmatpush1.msra.mxu0 0.0
    %644 = vmatprep.subr.mxu0 0.0
    %645 = vmatpush1.msra.mxu0 0.0
    %646 = vmatprep.subr.mxu0 0.0
    %647 = vmatpush1.msra.mxu0 0.0
    %648 = vmatprep.subr.mxu0 0.0
    %649 = vmatpush1.msra.mxu0 0.0
    %650 = vmatprep.subr.mxu0 0.0
    %651 = vmatpush1.msra.mxu0 0.0
    %652 = vmatprep.subr.mxu0 0.0
    %653 = vmatpush1.msra.mxu0 0.0
    %654 = vmatprep.subr.mxu0 0.0
    %655 = vmatpush1.msra.mxu0 0.0
    %656 = vmatprep.subr.mxu0 0.0
    %657 = vmatpush1.msra.mxu0 0.0
    %658 = vmatprep.subr.mxu0 0.0
    %659 = vmatpush1.msra.mxu0 0.0
    %660 = vmatprep.subr.mxu0 0.0
    %661 = vmatpush1.msra.mxu0 0.0
    %662 = vmatprep.subr.mxu0 0.0
    %663 = vmatpush1.msra.mxu0 0.0
    %664 = vmatprep.subr.mxu0 0.0
    %665 = vmatpush1.msra.mxu0 0.0
    %666 = vmatprep.subr.mxu0 0.0
    %667 = vmatpush1.msra.mxu0 0.0
    %668 = vmatprep.subr.mxu0 0.0
    %669 = vmatpush1.msra.mxu0 0.0
    %670 = vmatprep.subr.mxu0 0.0
    %671 = vmatpush1.msra.mxu0 0.0
    %672 = vmatprep.subr.mxu0 0.0
    %673 = vmatpush1.msra.mxu0 0.0
    %674 = vmatprep.subr.mxu0 0.0
    %675 = vmatpush1.msra.mxu0 0.0
    %676 = vmatprep.subr.mxu0 0.0
    %677 = vmatpush1.msra.mxu0 0.0
    %678 = vmatprep.subr.mxu0 0.0
    %679 = vmatpush1.msra.mxu0 0.0
    %680 = vmatprep.subr.mxu0 0.0
    %681 = vmatpush1.msra.mxu0 0.0
    %682 = vmatprep.subr.mxu0 0.0
    %683 = vmatpush1.msra.mxu0 0.0
    %684 = vmatprep.subr.mxu0 0.0
    %685 = vmatpush1.msra.mxu0 0.0
    %686 = vmatprep.subr.mxu0 0.0
    %687 = vmatpush1.msra.mxu0 0.0
    %688 = vmatprep.subr.mxu0 0.0
    %689 = vmatpush1.msra.mxu0 0.0
    %690 = vmatprep.mubr.f32.mxu0 0.0
    %691 = vmatmul.mubr.f32.gmra.mrb[0].mxu0 %v615
    %v692 = vpop.f32.mrb[0].mxu0
    %v693 = vadd.f32 %v613, %v692
    %v694 = vpop.f32.mrb[0].mxu0
    %695 = vmatprep.mubr.f32.mxu0 0.0
    %696 = vmatmul.mubr.f32.gmra.mrb[0].mxu0 %v618
    %v697 = vpop.f32.mrb[0].mxu0
    %v698 = vadd.f32 %v613, %v697
    %v699 = vpop.f32.mrb[0].mxu0
    %700 = vmatprep.mubr.f32.mxu0 0.0
    %701 = vmatmul.mubr.f32.gmra.mrb[0].mxu0 %v621
    %v702 = vpop.f32.mrb[0].mxu0
    %v703 = vadd.f32 %v613, %v702
    %v704 = vpop.f32.mrb[0].mxu0
    %705 = vmatprep.mubr.f32.mxu0 0.0
    %706 = vmatmul.mubr.f32.gmra.mrb[0].mxu0 %v624
    %v707 = vpop.f32.mrb[0].mxu0
    %v708 = vadd.f32 %v613, %v707
    %v709 = vpop.f32.mrb[0].mxu0
    %710 = vdwg.mxu0
    %v711 = vmax.f32 %v693, 0.0
    %v712 = vmax.f32 %v698, 0.0
    %v713 = vmax.f32 %v703, 0.0
    %v714 = vmax.f32 %v708, 0.0
    %v715 = vlaneseq
    %v716 = vshrl.u32 %v715, 7
    %v717 = vsub.s32 3, %v716
    %v718 = vrot.slane %v43, %v717
    %v720 = vsel %vm550, %v711, 0
    %v723 = vsel %vm550, %v712, 0
    %v726 = vsel %vm550, %v713, 0
    %v729 = vsel %vm550, %v714, 0
    %731 = vmatprep.subr.mxu0 0.0
    %732 = vmatpush1.msra.mxu0 %v42
    %733 = vmatprep.subr.mxu0 0.0
    %734 = vmatpush1.msra.mxu0 0.0
    %735 = vmatprep.subr.mxu0 0.0
    %736 = vmatpush1.msra.mxu0 0.0
    %737 = vmatprep.subr.mxu0 0.0
    %738 = vmatpush1.msra.mxu0 0.0
    %739 = vmatprep.subr.mxu0 0.0
    %740 = vmatpush1.msra.mxu0 0.0
    %741 = vmatprep.subr.mxu0 0.0
    %742 = vmatpush1.msra.mxu0 0.0
    %743 = vmatprep.subr.mxu0 0.0
    %744 = vmatpush1.msra.mxu0 0.0
    %745 = vmatprep.subr.mxu0 0.0
    %746 = vmatpush1.msra.mxu0 0.0
    %747 = vmatprep.subr.mxu0 0.0
    %748 = vmatpush1.msra.mxu0 0.0
    %749 = vmatprep.subr.mxu0 0.0
    %750 = vmatpush1.msra.mxu0 0.0
    %751 = vmatprep.subr.mxu0 0.0
    %752 = vmatpush1.msra.mxu0 0.0
    %753 = vmatprep.subr.mxu0 0.0
    %754 = vmatpush1.msra.mxu0 0.0
    %755 = vmatprep.subr.mxu0 0.0
    %756 = vmatpush1.msra.mxu0 0.0
    %757 = vmatprep.subr.mxu0 0.0
    %758 = vmatpush1.msra.mxu0 0.0
    %759 = vmatprep.subr.mxu0 0.0
    %760 = vmatpush1.msra.mxu0 0.0
    %761 = vmatprep.subr.mxu0 0.0
    %762 = vmatpush1.msra.mxu0 0.0
    %763 = vmatprep.subr.mxu0 0.0
    %764 = vmatpush1.msra.mxu0 0.0
    %765 = vmatprep.subr.mxu0 0.0
    %766 = vmatpush1.msra.mxu0 0.0
    %767 = vmatprep.subr.mxu0 0.0
    %768 = vmatpush1.msra.mxu0 0.0
    %769 = vmatprep.subr.mxu0 0.0
    %770 = vmatpush1.msra.mxu0 0.0
    %771 = vmatprep.subr.mxu0 0.0
    %772 = vmatpush1.msra.mxu0 0.0
    %773 = vmatprep.subr.mxu0 0.0
    %774 = vmatpush1.msra.mxu0 0.0
    %775 = vmatprep.subr.mxu0 0.0
    %776 = vmatpush1.msra.mxu0 0.0
    %777 = vmatprep.subr.mxu0 0.0
    %778 = vmatpush1.msra.mxu0 0.0
    %779 = vmatprep.subr.mxu0 0.0
    %780 = vmatpush1.msra.mxu0 0.0
    %781 = vmatprep.subr.mxu0 0.0
    %782 = vmatpush1.msra.mxu0 0.0
    %783 = vmatprep.subr.mxu0 0.0
    %784 = vmatpush1.msra.mxu0 0.0
    %785 = vmatprep.subr.mxu0 0.0
    %786 = vmatpush1.msra.mxu0 0.0
    %787 = vmatprep.subr.mxu0 0.0
    %788 = vmatpush1.msra.mxu0 0.0
    %789 = vmatprep.subr.mxu0 0.0
    %790 = vmatpush1.msra.mxu0 0.0
    %791 = vmatprep.subr.mxu0 0.0
    %792 = vmatpush1.msra.mxu0 0.0
    %793 = vmatprep.subr.mxu0 0.0
    %794 = vmatpush1.msra.mxu0 0.0
    %795 = vmatprep.mubr.f32.mxu0 0.0
    %796 = vmatmul.mubr.f32.gmra.mrb[0].mxu0 %v720
    %v797 = vpop.f32.mrb[0].mxu0
    %v798 = vadd.f32 %v718, %v797
    %v799 = vpop.f32.mrb[0].mxu0
    %800 = vmatprep.mubr.f32.mxu0 0.0
    %801 = vmatmul.mubr.f32.gmra.mrb[0].mxu0 %v723
    %v802 = vpop.f32.mrb[0].mxu0
    %v803 = vadd.f32 %v718, %v802
    %v804 = vpop.f32.mrb[0].mxu0
    %805 = vmatprep.mubr.f32.mxu0 0.0
    %806 = vmatmul.mubr.f32.gmra.mrb[0].mxu0 %v726
    %v807 = vpop.f32.mrb[0].mxu0
    %v808 = vadd.f32 %v718, %v807
    %v809 = vpop.f32.mrb[0].mxu0
    %810 = vmatprep.mubr.f32.mxu0 0.0
    %811 = vmatmul.mubr.f32.gmra.mrb[0].mxu0 %v729
    %v812 = vpop.f32.mrb[0].mxu0
    %v813 = vadd.f32 %v718, %v812
    %v814 = vpop.f32.mrb[0].mxu0
    %815 = vdwg.mxu0
    %816 = vst [vmem:[#allocation6] sm:$0xff] %v798
    %817 = vst [vmem:[#allocation6 + $0x8] sm:$0xff] %v803
    %818 = vst [vmem:[#allocation6 + $0x10] sm:$0xff] %v808
    %819 = vst [vmem:[#allocation6 + $0x18] sm:$0xff] %v813
    // Predicated region
    $region14: #{grapher_forward.1} parent=1 // pred_check
      _
    $region15: #{grapher_forward.1} parent=1 // pred_check_branch
      %821 = sbr.rel (0) target = $region17
    $region16: #{grapher_forward.1} parent=1 // pred_region
      %s823 = ssub.s32 512, 512
      %824 = vsyncadd [#allocation4], %s823
      %s825 = sshll.u32 [#allocation5], 4
      %s826 = int_to_ptr.vmem [resolvable:$true] %s825
      %831 = dma.vmem_to_hbm [thread:$0]  %s826, 512, %s2, [#allocation4], 128, 128, 8
    $region17: #{grapher_forward.1} parent=1 // pred_fallthru
      _
    // Predicated region
    $region18: #{grapher_forward.1} parent=1 // pred_check
      _
    $region19: #{grapher_forward.1} parent=1 // pred_check_branch
      %833 = sbr.rel (0) target = $region21
    $region20: #{grapher_forward.1} parent=1 // pred_region
      %s835 = ssub.s32 512, 512
      %836 = vsyncadd [#allocation7], %s835
      %s837 = sshll.u32 [#allocation6], 4
      %s838 = int_to_ptr.vmem [resolvable:$true] %s837
      %843 = dma.vmem_to_hbm [thread:$0]  %s838, 512, %s3, [#allocation7], 128, 128, 8
    $region21: #{grapher_forward.1} parent=1 // pred_fallthru
      _
    // Predicated region
    $region22: #{grapher_forward.1} parent=1 // pred_check
      _
    $region23: #{grapher_forward.1} parent=1 // pred_check_branch
      %845 = sbr.rel (0) target = $region25
    $region24: #{grapher_forward.1} parent=1 // pred_region
      %846 = dma.done [#allocation4], 512
    $region25: #{grapher_forward.1} parent=1 // pred_fallthru
      _
    // Predicated region
    $region26: #{grapher_forward.1} parent=1 // pred_check
      _
    $region27: #{grapher_forward.1} parent=1 // pred_check_branch
      %848 = sbr.rel (0) target = $region29
    $region28: #{grapher_forward.1} parent=1 // pred_region
      %849 = dma.done [#allocation7], 512
    $region29: #{grapher_forward.1} parent=1 // pred_fallthru
      _
    %850 = vsyncpa [#allocation3], 1
    %851 = vsyncpa [#allocation4], 1
    %852 = vsyncpa [#allocation7], 1

</llo_original>
